<compile_context>
chip_gen: v6e
topology: v6e:2x2x1
jax: 0.10.0
libtpu: 0.0.40
codegen_flags: <defaults>
</compile_context>

<pallas_src>
import functools

import jax
import jax.numpy as jnp
from jax.experimental import pallas as pl
from jax.experimental.pallas import tpu as pltpu


def _round_up(x, m):
    return (x + m - 1) // m * m


# ---------------------------------------------------------------------------
# Kernel bodies
# ---------------------------------------------------------------------------
def _conv_pool_fc(emb_pad, w_ref, b_ref, mask_ref, fcw_ref, fcb_ref, out_ref,
                  *, k_max, k_pad, seq_len):
    """im2col conv (all banks lane-packed) + ReLU + masked max-pool + FC.

    emb_pad: (TB, seq_len + k_max - 1, E) bf16, zero-padded at the tail so every
    conv tap is a static slice (no zero-tail concats per tap).
    """
    tb = emb_pad.shape[0]
    e = emb_pad.shape[-1]

    # bf16 im2col LHS: tap j = sequence shifted by j (static slice of the
    # padded buffer); lane-concat taps, pad K up to k_pad (MXU-aligned).
    taps = [emb_pad[:, j:j + seq_len, :] for j in range(k_max)]
    if k_pad > k_max * e:
        taps.append(jnp.zeros((tb, seq_len, k_pad - k_max * e), emb_pad.dtype))
    x2 = jnp.concatenate(taps, axis=-1).reshape(tb * seq_len, k_pad)

    # One MXU matmul covering all filter banks (f32 accumulate).
    conv = jnp.dot(x2, w_ref[...], preferred_element_type=jnp.float32)
    conv = conv.reshape(tb, seq_len, -1) + b_ref[...]      # + packed bias (1, Fpad)
    conv = jnp.maximum(conv, 0.0)                          # ReLU (f32: v5e-safe VPU)
    conv = conv * mask_ref[...]                            # zero invalid tail rows
    pooled = jnp.max(conv, axis=1)                         # (TB, Fpad)

    # TODO(synk): dropout is eval-mode identity (no RNG mask applied).
    logits = jnp.dot(pooled.astype(fcw_ref.dtype), fcw_ref[...],
                     preferred_element_type=jnp.float32) + fcb_ref[...]
    out_ref[...] = logits.astype(out_ref.dtype)            # lane-dense (TB, Opad)


def _textcnn_kernel(emb_ref, w_ref, b_ref, mask_ref, fcw_ref, fcb_ref, out_ref,
                    *, k_max, k_pad, seq_len):
    """Pre-gathered path: emb_ref is a (TB, S+k_max-1, E) bf16 padded block."""
    _conv_pool_fc(emb_ref[...], w_ref, b_ref, mask_ref, fcw_ref, fcb_ref,
                  out_ref, k_max=k_max, k_pad=k_pad, seq_len=seq_len)


def _textcnn_fused_kernel(ids_ref, tbl_ref, w_ref, b_ref, mask_ref, fcw_ref,
                          fcb_ref, out_ref, *, k_max, k_pad, seq_len):
    """Small-vocab path: embedding gather fused in-kernel as one-hot MXU matmul."""
    ids = ids_ref[...]                                     # (TB, S) int32
    tb, s = ids.shape
    v_pad, e = tbl_ref.shape

    iota_v = jax.lax.broadcasted_iota(jnp.int32, (tb, s, v_pad), 2)
    onehot = (ids[:, :, None] == iota_v).astype(tbl_ref.dtype)   # (TB, S, Vpad) bf16
    emb = jnp.dot(onehot.reshape(tb * s, v_pad), tbl_ref[...],
                  preferred_element_type=jnp.float32)
    emb = emb.astype(jnp.bfloat16).reshape(tb, s, e)       # exact (one-hot select)

    if k_max > 1:   # single zero tail block so conv taps are static slices
        emb_pad = jnp.concatenate(
            [emb, jnp.zeros((tb, k_max - 1, e), emb.dtype)], axis=1)
    else:
        emb_pad = emb
    _conv_pool_fc(emb_pad, w_ref, b_ref, mask_ref, fcw_ref, fcb_ref, out_ref,
                  k_max=k_max, k_pad=k_pad, seq_len=seq_len)


# ---------------------------------------------------------------------------
# One-time parameter packing (kept out of the forward hot path)
# ---------------------------------------------------------------------------
def pack_params(params, *, kernel_lst, sent_len):
    emb_tbl = params["embedding"]
    vocab, e = emb_tbl.shape
    f = params["conv_b"][0].shape[-1]
    n_banks = len(kernel_lst)
    k_max = max(kernel_lst)
    out_size = params["fc_b"].shape[-1]

    f_pad = _round_up(f * n_banks, 128)     # lane-dense packed filter dim
    o_pad = _round_up(out_size, 128)        # lane-dense output dim
    k_pad = _round_up(k_max * e, 128)       # MXU-aligned contracted (im2col) dim
    v_pad = _round_up(vocab, 128)           # aligned one-hot / table rows

    w_packed = jnp.zeros((k_pad, f_pad), jnp.float32)
    b_packed = jnp.zeros((1, f_pad), jnp.float32)
    mask = jnp.zeros((sent_len, f_pad), jnp.float32)
    for i, k in enumerate(kernel_lst):
        w_k = params["conv_w"][i].reshape(k * e, f)        # (k, E, F) -> (k*E, F)
        w_packed = w_packed.at[:k * e, i * f:(i + 1) * f].set(w_k)
        b_packed = b_packed.at[:, i * f:(i + 1) * f].set(
            params["conv_b"][i].reshape(1, f))
        valid = sent_len - k + 1
        mask = mask.at[:valid, i * f:(i + 1) * f].set(1.0)

    fcw = jnp.zeros((f_pad, o_pad), jnp.float32)
    fcw = fcw.at[:f * n_banks, :out_size].set(params["fc_w"])
    fcb = jnp.zeros((1, o_pad), jnp.float32)
    fcb = fcb.at[:, :out_size].set(params["fc_b"].reshape(1, out_size))

    tbl = jnp.zeros((v_pad, e), jnp.float32).at[:vocab].set(emb_tbl)

    return {
        "emb_tbl": tbl.astype(jnp.bfloat16),       # (Vpad, E) bf16
        "conv_w": w_packed.astype(jnp.bfloat16),   # (Kpad, Fpad) bf16
        "conv_b": b_packed,                        # (1, Fpad) f32
        "mask": mask,                              # (S, Fpad) f32
        "fc_w": fcw.astype(jnp.bfloat16),          # (Fpad, Opad) bf16
        "fc_b": fcb,                               # (1, Opad) f32
        "meta": dict(e=e, f_pad=f_pad, o_pad=o_pad, k_pad=k_pad, v_pad=v_pad,
                     k_max=k_max, out_size=out_size, vocab=vocab,
                     sent_len=sent_len),
    }


def _pick_block_b(*, sent_len, s_pad, e, k_pad, f_pad, o_pad, v_pad, fused,
                  budget_bytes=20 * 1024 * 1024):
    """Largest batch tile whose in-kernel VMEM footprint fits the budget."""
    per_b = 0
    if fused:
        per_b += 2 * sent_len * 4            # token-id block (double-buffered DMA)
        per_b += 2 * sent_len * v_pad * 2    # one-hot / compare intermediates
        per_b += s_pad * e * 2               # padded emb buffer (bf16)
    else:
        per_b += 2 * s_pad * e * 2           # emb block (bf16, double-buffered DMA)
        per_b += s_pad * e * 2               # in-register copy
    per_b += sent_len * k_pad * 2            # im2col LHS (bf16)
    per_b += sent_len * f_pad * 4            # conv accumulator chain (f32)
    per_b += 2 * o_pad * 4                   # output block (f32, double-buffered)
    bb = budget_bytes // max(per_b, 1)
    return int(max(8, min(512, (bb // 8) * 8)))


# ---------------------------------------------------------------------------
# Forward
# ---------------------------------------------------------------------------
def textcnn_forward(token_ids, packed, *, block_b=None, fuse_gather=None):
    meta = packed["meta"]
    sent_len, k_max = meta["sent_len"], meta["k_max"]
    e, f_pad, o_pad = meta["e"], meta["f_pad"], meta["o_pad"]
    k_pad, v_pad = meta["k_pad"], meta["v_pad"]
    out_size = meta["out_size"]

    assert sent_len >= k_max, "sentence shorter than largest conv kernel"
    batch, seq = token_ids.shape
    assert seq == sent_len

    if fuse_gather is None:
        # One-hot MXU gather only pays while the table / one-hot stay small.
        fuse_gather = v_pad <= 512

    s_pad = sent_len + k_max - 1

    bb_full = _round_up(batch, 8)
    if block_b is None:
        block_b = min(
            _pick_block_b(sent_len=sent_len, s_pad=s_pad, e=e, k_pad=k_pad,
                          f_pad=f_pad, o_pad=o_pad, v_pad=v_pad,
                          fused=fuse_gather),
            bb_full)
        # Prefer >= 2 grid steps when the batch allows it (megacore / v7x 2nd TC).
        if bb_full > 8 and pl.cdiv(bb_full, block_b) < 2:
            block_b = max(8, _round_up(pl.cdiv(bb_full, 2), 8))
    b_pad = _round_up(batch, block_b)
    grid = (b_pad // block_b,)

    const_specs = [
        pl.BlockSpec((k_pad, f_pad), lambda i: (0, 0)),      # packed conv weight
        pl.BlockSpec((1, f_pad), lambda i: (0, 0)),          # packed conv bias
        pl.BlockSpec((sent_len, f_pad), lambda i: (0, 0)),   # valid-position mask
        pl.BlockSpec((f_pad, o_pad), lambda i: (0, 0)),      # fc weight
        pl.BlockSpec((1, o_pad), lambda i: (0, 0)),          # fc bias
    ]
    const_args = (packed["conv_w"], packed["conv_b"], packed["mask"],
                  packed["fc_w"], packed["fc_b"])
    compiler_params = pltpu.CompilerParams(
        dimension_semantics=("parallel",),
        vmem_limit_bytes=48 * 1024 * 1024)
    out_shape = jax.ShapeDtypeStruct((b_pad, o_pad), jnp.float32)
    out_spec = pl.BlockSpec((block_b, o_pad), lambda i: (i, 0))

    if fuse_gather:
        ids = token_ids.astype(jnp.int32)
        if b_pad != batch:
            ids = jnp.pad(ids, ((0, b_pad - batch), (0, 0)))
        kernel = functools.partial(_textcnn_fused_kernel, k_max=k_max,
                                   k_pad=k_pad, seq_len=sent_len)
        out = pl.pallas_call(
            kernel, out_shape=out_shape, grid=grid,
            in_specs=[pl.BlockSpec((block_b, sent_len), lambda i: (i, 0)),
                      pl.BlockSpec((v_pad, e), lambda i: (0, 0))] + const_specs,
            out_specs=out_spec, compiler_params=compiler_params,
        )(ids, packed["emb_tbl"], *const_args)
    else:
        # TODO(synk): for very large vocabularies the gather could be fused via
        # PrefetchScalarGridSpec + pl.Element row-gather against the HBM table;
        # here it stays as plain-JAX glue.
        emb = jnp.take(packed["emb_tbl"], token_ids, axis=0)   # (B, S, E) bf16
        emb = jnp.pad(emb, ((0, b_pad - batch), (0, k_max - 1), (0, 0)))
        kernel = functools.partial(_textcnn_kernel, k_max=k_max, k_pad=k_pad,
                                   seq_len=sent_len)
        out = pl.pallas_call(
            kernel, out_shape=out_shape, grid=grid,
            in_specs=[pl.BlockSpec((block_b, s_pad, e), lambda i: (i, 0, 0))]
                     + const_specs,
            out_specs=out_spec, compiler_params=compiler_params,
        )(emb, *const_args)

    return out[:batch, :out_size]


# ---------------------------------------------------------------------------
# Init + pure-JAX reference
# ---------------------------------------------------------------------------
def init_params(key, vocab_size, embedding_dim, output_size,
                filter_num, kernel_lst):
    n_keys = 2 + 2 * len(kernel_lst) + 2
    ks = list(jax.random.split(key, n_keys))
    params = {}
    params["embedding"] = 0.1 * jax.random.normal(
        ks.pop(), (vocab_size, embedding_dim), jnp.float32)
    conv_w, conv_b = [], []
    for k in kernel_lst:
        # PyTorch Conv2d weight (F, 1, k, E) -> stored as (k, E, F)
        conv_w.append(0.1 * jax.random.normal(
            ks.pop(), (k, embedding_dim, filter_num), jnp.float32))
        conv_b.append(0.1 * jax.random.normal(
            ks.pop(), (1, filter_num), jnp.float32))
    params["conv_w"] = conv_w
    params["conv_b"] = conv_b
    feat_dim = filter_num * len(kernel_lst)
    # PyTorch Linear weight (out, 3F) -> stored transposed as (3F, out)
    params["fc_w"] = 0.1 * jax.random.normal(
        ks.pop(), (feat_dim, output_size), jnp.float32)
    params["fc_b"] = 0.1 * jax.random.normal(
        ks.pop(), (1, output_size), jnp.float32)
    return params


def _reference_forward(token_ids, params, *, kernel_lst, sent_len):
    """Pure-JAX f32 reference matching the PyTorch module (eval mode)."""
    emb = jnp.take(params["embedding"], token_ids, axis=0)  # (B, S, E)
    feats = []
    for i, k in enumerate(kernel_lst):
        w = params["conv_w"][i]                              # (k, E, F)
        valid = sent_len - k + 1
        acc = jnp.zeros((emb.shape[0], valid, w.shape[-1]), jnp.float32)
        for j in range(k):
            acc = acc + jnp.einsum("bse,ef->bsf", emb[:, j:j + valid, :], w[j])
        acc = jax.nn.relu(acc + params["conv_b"][i])
        feats.append(jnp.max(acc, axis=1))                   # (B, F)
    feat = jnp.concatenate(feats, axis=-1)                   # (B, 3F)
    return feat @ params["fc_w"] + params["fc_b"]


if __name__ == "__main__":
    VOCAB_SIZE = 50
    EMBEDDING_DIM = 32
    OUTPUT_SIZE = 4
    SENTENCE_LIMIT_SIZE = 16
    FILTER_NUM = 8
    KERNEL_LST = (3, 4, 5)
    BATCH = 2

    root = jax.random.PRNGKey(0)
    k_params, k_ids = jax.random.split(root)
    params = init_params(k_params, VOCAB_SIZE, EMBEDDING_DIM, OUTPUT_SIZE,
                         FILTER_NUM, KERNEL_LST)
    token_ids = jax.random.randint(k_ids, (BATCH, SENTENCE_LIMIT_SIZE),
                                   0, VOCAB_SIZE, dtype=jnp.int32)

    packed = pack_params(params, kernel_lst=KERNEL_LST,
                         sent_len=SENTENCE_LIMIT_SIZE)
    ref = _reference_forward(token_ids, params, kernel_lst=KERNEL_LST,
                             sent_len=SENTENCE_LIMIT_SIZE)

    # Fused-gather path (small vocab: in-kernel one-hot MXU gather).
    logits = textcnn_forward(token_ids, packed)
    jax.block_until_ready(logits)
    assert logits.shape == (BATCH, OUTPUT_SIZE)
    assert jnp.allclose(logits, ref, rtol=5e-2, atol=5e-2), "fused-gather mismatch"

    # Fallback path (XLA gather outside the kernel, pre-padded sequence).
    logits2 = textcnn_forward(token_ids, packed, fuse_gather=False)
    jax.block_until_ready(logits2)
    assert logits2.shape == (BATCH, OUTPUT_SIZE)
    assert jnp.allclose(logits2, ref, rtol=5e-2, atol=5e-2), "fallback mismatch"

    print("KERNEL_OK")
</pallas_src>

<mosaic_0001>
module attributes {stable_mosaic.version = 11 : i64} {
  func.func @_textcnn_fused_kernel(%arg0: i32, %arg1: memref<8x16xi32, #tpu.memory_space<vmem>>, %arg2: memref<128x32xbf16, #tpu.memory_space<vmem>>, %arg3: memref<256x128xbf16, #tpu.memory_space<vmem>>, %arg4: memref<1x128xf32, #tpu.memory_space<vmem>>, %arg5: memref<16x128xf32, #tpu.memory_space<vmem>>, %arg6: memref<128x128xbf16, #tpu.memory_space<vmem>>, %arg7: memref<1x128xf32, #tpu.memory_space<vmem>>, %arg8: memref<8x128xf32, #tpu.memory_space<vmem>>) attributes {dimension_semantics = [#tpu.dimension_semantics<parallel>], iteration_bounds = array<i64: 1>, scalar_prefetch = 0 : i64, scratch_operands = 0 : i64, tpu.core_type = #tpu.core_type<tc>, window_params = [{transform_indices = @transform_0, window_bounds = array<i64: 8, 16>}, {pipeline_mode = #tpu.pipeline_mode<synchronous>, transform_indices = @transform_1, window_bounds = array<i64: 128, 32>}, {pipeline_mode = #tpu.pipeline_mode<synchronous>, transform_indices = @transform_2, window_bounds = array<i64: 256, 128>}, {pipeline_mode = #tpu.pipeline_mode<synchronous>, transform_indices = @transform_3, window_bounds = array<i64: 1, 128>}, {pipeline_mode = #tpu.pipeline_mode<synchronous>, transform_indices = @transform_4, window_bounds = array<i64: 16, 128>}, {pipeline_mode = #tpu.pipeline_mode<synchronous>, transform_indices = @transform_5, window_bounds = array<i64: 128, 128>}, {pipeline_mode = #tpu.pipeline_mode<synchronous>, transform_indices = @transform_6, window_bounds = array<i64: 1, 128>}, {transform_indices = @transform_7, window_bounds = array<i64: 8, 128>}]} {
    %c0 = arith.constant 0 : index
    %c0_0 = arith.constant 0 : index
    %0 = vector.load %arg1[%c0, %c0_0] : memref<8x16xi32, #tpu.memory_space<vmem>>, vector<8x16xi32>
    %1 = tpu.iota {dimensions = array<i32: 2>} : vector<8x16x128xi32>
    %2 = vector.shape_cast %0 : vector<8x16xi32> to vector<8x16x1xi32>
    %3 = vector.broadcast %2 : vector<8x16x1xi32> to vector<8x16x128xi32>
    %4 = arith.cmpi eq, %3, %1 : vector<8x16x128xi32>
    %5 = arith.extui %4 : vector<8x16x128xi1> to vector<8x16x128xi32>
    %6 = arith.sitofp %5 : vector<8x16x128xi32> to vector<8x16x128xf32>
    %7 = arith.truncf %6 : vector<8x16x128xf32> to vector<8x16x128xbf16>
    %8 = vector.shape_cast %7 : vector<8x16x128xbf16> to vector<128x128xbf16>
    %c0_1 = arith.constant 0 : index
    %c0_2 = arith.constant 0 : index
    %9 = vector.load %arg2[%c0_1, %c0_2] : memref<128x32xbf16, #tpu.memory_space<vmem>>, vector<128x32xbf16>
    %cst = arith.constant dense<0.000000e+00> : vector<128x32xf32>
    %10 = tpu.matmul %8, %9, %cst {dimension_numbers = #tpu.dot_dimension_numbers<[1], [0], [0], [1], [0, 0, 1, 1], [], []>} : vector<128x128xbf16>, vector<128x32xbf16>, vector<128x32xf32> -> vector<128x32xf32>
    %11 = arith.truncf %10 : vector<128x32xf32> to vector<128x32xbf16>
    %12 = vector.shape_cast %11 : vector<128x32xbf16> to vector<8x16x32xbf16>
    %cst_3 = arith.constant 0.000000e+00 : bf16
    %13 = vector.broadcast %cst_3 : bf16 to vector<8x4x32xbf16>
    %14 = tpu.concatenate %12, %13 in 1 : vector<8x16x32xbf16>, vector<8x4x32xbf16> -> vector<8x20x32xbf16>
    %15 = vector.extract_strided_slice %14 {offsets = [0, 0, 0], sizes = [8, 16, 32], strides = [1, 1, 1]} : vector<8x20x32xbf16> to vector<8x16x32xbf16>
    %16 = vector.extract_strided_slice %14 {offsets = [0, 1, 0], sizes = [8, 16, 32], strides = [1, 1, 1]} : vector<8x20x32xbf16> to vector<8x16x32xbf16>
    %17 = vector.extract_strided_slice %14 {offsets = [0, 2, 0], sizes = [8, 16, 32], strides = [1, 1, 1]} : vector<8x20x32xbf16> to vector<8x16x32xbf16>
    %18 = vector.extract_strided_slice %14 {offsets = [0, 3, 0], sizes = [8, 16, 32], strides = [1, 1, 1]} : vector<8x20x32xbf16> to vector<8x16x32xbf16>
    %19 = vector.extract_strided_slice %14 {offsets = [0, 4, 0], sizes = [8, 16, 32], strides = [1, 1, 1]} : vector<8x20x32xbf16> to vector<8x16x32xbf16>
    %cst_4 = arith.constant 0.000000e+00 : bf16
    %20 = vector.broadcast %cst_4 : bf16 to vector<8x16x96xbf16>
    %21 = tpu.concatenate %15, %16, %17, %18, %19, %20 in 2 : vector<8x16x32xbf16>, vector<8x16x32xbf16>, vector<8x16x32xbf16>, vector<8x16x32xbf16>, vector<8x16x32xbf16>, vector<8x16x96xbf16> -> vector<8x16x256xbf16>
    %22 = vector.shape_cast %21 : vector<8x16x256xbf16> to vector<128x256xbf16>
    %c0_5 = arith.constant 0 : index
    %c0_6 = arith.constant 0 : index
    %23 = vector.load %arg3[%c0_5, %c0_6] : memref<256x128xbf16, #tpu.memory_space<vmem>>, vector<256x128xbf16>
    %cst_7 = arith.constant dense<0.000000e+00> : vector<128x128xf32>
    %24 = tpu.matmul %22, %23, %cst_7 {dimension_numbers = #tpu.dot_dimension_numbers<[1], [0], [0], [1], [0, 0, 1, 1], [], []>} : vector<128x256xbf16>, vector<256x128xbf16>, vector<128x128xf32> -> vector<128x128xf32>
    %25 = vector.shape_cast %24 : vector<128x128xf32> to vector<8x16x128xf32>
    %c0_8 = arith.constant 0 : index
    %c0_9 = arith.constant 0 : index
    %26 = vector.load %arg4[%c0_8, %c0_9] : memref<1x128xf32, #tpu.memory_space<vmem>>, vector<1x128xf32>
    %27 = vector.shape_cast %26 : vector<1x128xf32> to vector<1x1x128xf32>
    %28 = vector.broadcast %27 : vector<1x1x128xf32> to vector<8x16x128xf32>
    %29 = arith.addf %25, %28 : vector<8x16x128xf32>
    %cst_10 = arith.constant 0.000000e+00 : f32
    %30 = vector.broadcast %cst_10 : f32 to vector<8x16x128xf32>
    %31 = arith.maximumf %29, %30 : vector<8x16x128xf32>
    %c0_11 = arith.constant 0 : index
    %c0_12 = arith.constant 0 : index
    %32 = vector.load %arg5[%c0_11, %c0_12] : memref<16x128xf32, #tpu.memory_space<vmem>>, vector<16x128xf32>
    %33 = vector.shape_cast %32 : vector<16x128xf32> to vector<1x16x128xf32>
    %34 = vector.broadcast %33 : vector<1x16x128xf32> to vector<8x16x128xf32>
    %35 = arith.mulf %31, %34 : vector<8x16x128xf32>
    %cst_13 = arith.constant dense<0xFF800000> : vector<8x128xf32>
    %36 = vector.multi_reduction <maximumf>, %35, %cst_13 [1] : vector<8x16x128xf32> to vector<8x128xf32>
    %37 = arith.truncf %36 : vector<8x128xf32> to vector<8x128xbf16>
    %c0_14 = arith.constant 0 : index
    %c0_15 = arith.constant 0 : index
    %38 = vector.load %arg6[%c0_14, %c0_15] : memref<128x128xbf16, #tpu.memory_space<vmem>>, vector<128x128xbf16>
    %cst_16 = arith.constant dense<0.000000e+00> : vector<8x128xf32>
    %39 = tpu.matmul %37, %38, %cst_16 {dimension_numbers = #tpu.dot_dimension_numbers<[1], [0], [0], [1], [0, 0, 1, 1], [], []>} : vector<8x128xbf16>, vector<128x128xbf16>, vector<8x128xf32> -> vector<8x128xf32>
    %c0_17 = arith.constant 0 : index
    %c0_18 = arith.constant 0 : index
    %40 = vector.load %arg7[%c0_17, %c0_18] : memref<1x128xf32, #tpu.memory_space<vmem>>, vector<1x128xf32>
    %41 = vector.broadcast %40 : vector<1x128xf32> to vector<8x128xf32>
    %42 = arith.addf %39, %41 : vector<8x128xf32>
    %c0_19 = arith.constant 0 : index
    %c0_20 = arith.constant 0 : index
    %43 = vector.load %arg8[%c0_19, %c0_20] : memref<8x128xf32, #tpu.memory_space<vmem>>, vector<8x128xf32>
    tpu.vector_store %arg8[%c0_19, %c0_20], %42 {strides = array<i32>} : memref<8x128xf32, #tpu.memory_space<vmem>>, vector<8x128xf32>,
    return
  }
  func.func @transform_0(%arg0: i32) -> (i32, i32) {
    %c0_i32 = arith.constant 0 : i32
    %c0_i32_0 = arith.constant 0 : i32
    return %arg0, %c0_i32 : i32, i32
  }
  func.func @transform_1(%arg0: i32) -> (i32, i32) {
    %c0_i32 = arith.constant 0 : i32
    %c0_i32_0 = arith.constant 0 : i32
    %c0_i32_1 = arith.constant 0 : i32
    return %c0_i32, %c0_i32_0 : i32, i32
  }
  func.func @transform_2(%arg0: i32) -> (i32, i32) {
    %c0_i32 = arith.constant 0 : i32
    %c0_i32_0 = arith.constant 0 : i32
    %c0_i32_1 = arith.constant 0 : i32
    return %c0_i32, %c0_i32_0 : i32, i32
  }
  func.func @transform_3(%arg0: i32) -> (i32, i32) {
    %c0_i32 = arith.constant 0 : i32
    %c0_i32_0 = arith.constant 0 : i32
    %c0_i32_1 = arith.constant 0 : i32
    return %c0_i32, %c0_i32_0 : i32, i32
  }
  func.func @transform_4(%arg0: i32) -> (i32, i32) {
    %c0_i32 = arith.constant 0 : i32
    %c0_i32_0 = arith.constant 0 : i32
    %c0_i32_1 = arith.constant 0 : i32
    return %c0_i32, %c0_i32_0 : i32, i32
  }
  func.func @transform_5(%arg0: i32) -> (i32, i32) {
    %c0_i32 = arith.constant 0 : i32
    %c0_i32_0 = arith.constant 0 : i32
    %c0_i32_1 = arith.constant 0 : i32
    return %c0_i32, %c0_i32_0 : i32, i32
  }
  func.func @transform_6(%arg0: i32) -> (i32, i32) {
    %c0_i32 = arith.constant 0 : i32
    %c0_i32_0 = arith.constant 0 : i32
    %c0_i32_1 = arith.constant 0 : i32
    return %c0_i32, %c0_i32_0 : i32, i32
  }
  func.func @transform_7(%arg0: i32) -> (i32, i32) {
    %c0_i32 = arith.constant 0 : i32
    %c0_i32_0 = arith.constant 0 : i32
    return %arg0, %c0_i32 : i32, i32
  }
}

</mosaic_0001>

<llo_original>
// kernel: tpu_custom_call.1
$region0: #{tpu_custom_call.1}
  #allocation0 [shape = 'u32[]', space=smem, size = 0x4, offset = 0x4, fixed_abs, tag = 'smem constant byte address 0x4 - core index']
  #allocation1 [shape = 'u32[144,128]{1,0:T(1,128)}', space=vmem, size = 0x12000, scoped, tag = 'internal scratch']
  %s0 = inlined_call_operand.vmem [shape: s32[8,16], index: 0, kind: input, shape index: {}]
  %s1 = inlined_call_operand.vmem [shape: bf16[128,32], index: 1, kind: input, shape index: {}]
  %s2 = inlined_call_operand.hbm [shape: bf16[256,128], index: 2, kind: input, shape index: {}]
  %s3 = inlined_call_operand.vmem [shape: f32[1,128], index: 3, kind: input, shape index: {}]
  %s4 = inlined_call_operand.vmem [shape: f32[16,128], index: 4, kind: input, shape index: {}]
  %s5 = inlined_call_operand.vmem [shape: bf16[128,128], index: 5, kind: input, shape index: {}]
  %s6 = inlined_call_operand.vmem [shape: f32[1,128], index: 6, kind: input, shape index: {}]
  %s7 = inlined_call_operand.hbm [shape: f32[8,128], index: 7, kind: output, shape index: {}]
  %s8 = sld [smem:[#allocation0]]
  $region42: #{tpu_custom_call.1} parent=0
    _
  %s10 = ssub.s32 1, %s8
  %s11 = scalar_select 0, %s10, %s8
  $region1: #{tpu_custom_call.1} parent=0
    #allocation2 [shape = 'u8[65536]{0}', space=vmem, size = 0x10000, scoped, tag = 'input window, operand 2, single buffered']
    #allocation3 [shape = 's32[1]{0}', space=sflag, size = 0x4, scoped, tag = 'scoped memory for tpu_custom_call.1']
    #allocation4 [shape = 's32[1]{0}', space=sflag, size = 0x4, scoped, tag = 'scoped memory for tpu_custom_call.1']
    #allocation5 [shape = 'u8[4096]{0}', space=vmem, size = 0x1000, scoped, tag = 'output window, operand 0, single buffered']
    %12 = vsyncpa [#allocation3], 0
    %13 = vsyncpa [#allocation4], 0
    // Predicated region
    $region2: #{tpu_custom_call.1} parent=1 // pred_check
      _
    $region3: #{tpu_custom_call.1} parent=1 // pred_check_branch
      %15 = sbr.rel (0) target = $region5
    $region4: #{tpu_custom_call.1} parent=1 // pred_region
      _
    $region5: #{tpu_custom_call.1} parent=1 // pred_fallthru
      _
    // Predicated region
    $region6: #{tpu_custom_call.1} parent=1 // pred_check
      _
    $region7: #{tpu_custom_call.1} parent=1 // pred_check_branch
      %17 = sbr.rel (0) target = $region9
    $region8: #{tpu_custom_call.1} parent=1 // pred_region
      _
    $region9: #{tpu_custom_call.1} parent=1 // pred_fallthru
      _
    // Predicated region
    $region10: #{tpu_custom_call.1} parent=1 // pred_check
      _
    $region11: #{tpu_custom_call.1} parent=1 // pred_check_branch
      %19 = sbr.rel (0) target = $region13
    $region12: #{tpu_custom_call.1} parent=1 // pred_region
      %s21 = ssub.s32 2048, 2048
      %22 = vsyncadd [#allocation3], %s21
      %s23 = sshll.u32 [#allocation2], 4
      %s24 = int_to_ptr.vmem [resolvable:$true] %s23
      %29 = dma.hbm_to_vmem [thread:$0]  %s2, 2048, %s24, [#allocation3], 64, 64, 4
    $region13: #{tpu_custom_call.1} parent=1 // pred_fallthru
      _
    // Predicated region
    $region14: #{tpu_custom_call.1} parent=1 // pred_check
      _
    $region15: #{tpu_custom_call.1} parent=1 // pred_check_branch
      %31 = sbr.rel (0) target = $region17
    $region16: #{tpu_custom_call.1} parent=1 // pred_region
      _
    $region17: #{tpu_custom_call.1} parent=1 // pred_fallthru
      _
    // Predicated region
    $region18: #{tpu_custom_call.1} parent=1 // pred_check
      _
    $region19: #{tpu_custom_call.1} parent=1 // pred_check_branch
      %33 = sbr.rel (0) target = $region21
    $region20: #{tpu_custom_call.1} parent=1 // pred_region
      _
    $region21: #{tpu_custom_call.1} parent=1 // pred_fallthru
      _
    // Predicated region
    $region22: #{tpu_custom_call.1} parent=1 // pred_check
      _
    $region23: #{tpu_custom_call.1} parent=1 // pred_check_branch
      %35 = sbr.rel (0) target = $region25
    $region24: #{tpu_custom_call.1} parent=1 // pred_region
      _
    $region25: #{tpu_custom_call.1} parent=1 // pred_fallthru
      _
    // Predicated region
    $region26: #{tpu_custom_call.1} parent=1 // pred_check
      _
    $region27: #{tpu_custom_call.1} parent=1 // pred_check_branch
      %37 = sbr.rel (0) target = $region29
    $region28: #{tpu_custom_call.1} parent=1 // pred_region
      _
    $region29: #{tpu_custom_call.1} parent=1 // pred_fallthru
      _
    // Predicated region
    $region30: #{tpu_custom_call.1} parent=1 // pred_check
      _
    $region31: #{tpu_custom_call.1} parent=1 // pred_check_branch
      %39 = sbr.rel (0) target = $region33
    $region32: #{tpu_custom_call.1} parent=1 // pred_region
      %40 = dma.done [#allocation3], 2048
    $region33: #{tpu_custom_call.1} parent=1 // pred_fallthru
      _
    %v42 = vld [vmem:[%s0] sm:$0xff]
    %v43 = vlaneseq
    %v44 = vand.u32 %v43, 127
    %v45 = vlaneseq
    %v46 = vshrl.u32 %v45, 7
    %v47 = vsub.s32 0, %v46
    %v48 = vrot.slane %v42, %v47
    %50 = vbcast.lane.b32.xlu0 %v48, 256
    %v51 = vpop.permute.xlu0 %50
    %s53 = sor.u32 256, 8
    %54 = vbcast.lane.b32.xlu0 %v48, %s53
    %v55 = vpop.permute.xlu0 %54
    %v56 = vlaneseq
    %v57 = vshrl.u32 %v56, 7
    %v58 = vsub.s32 1, %v57
    %v59 = vrot.slane %v42, %v58
    %61 = vbcast.lane.b32.xlu0 %v59, 256
    %v62 = vpop.permute.xlu0 %61
    %s64 = sor.u32 256, 8
    %65 = vbcast.lane.b32.xlu0 %v59, %s64
    %v66 = vpop.permute.xlu0 %65
    %v67 = vlaneseq
    %v68 = vshrl.u32 %v67, 7
    %v69 = vsub.s32 2, %v68
    %v70 = vrot.slane %v42, %v69
    %72 = vbcast.lane.b32.xlu0 %v70, 256
    %v73 = vpop.permute.xlu0 %72
    %s75 = sor.u32 256, 8
    %76 = vbcast.lane.b32.xlu0 %v70, %s75
    %v77 = vpop.permute.xlu0 %76
    %v78 = vlaneseq
    %v79 = vshrl.u32 %v78, 7
    %v80 = vsub.s32 3, %v79
    %v81 = vrot.slane %v42, %v80
    %83 = vbcast.lane.b32.xlu0 %v81, 256
    %v84 = vpop.permute.xlu0 %83
    %s86 = sor.u32 256, 8
    %87 = vbcast.lane.b32.xlu0 %v81, %s86
    %v88 = vpop.permute.xlu0 %87
    %v89 = vlaneseq
    %v90 = vshrl.u32 %v89, 7
    %v91 = vsub.s32 4, %v90
    %v92 = vrot.slane %v42, %v91
    %94 = vbcast.lane.b32.xlu0 %v92, 256
    %v95 = vpop.permute.xlu0 %94
    %s97 = sor.u32 256, 8
    %98 = vbcast.lane.b32.xlu0 %v92, %s97
    %v99 = vpop.permute.xlu0 %98
    %v100 = vlaneseq
    %v101 = vshrl.u32 %v100, 7
    %v102 = vsub.s32 5, %v101
    %v103 = vrot.slane %v42, %v102
    %105 = vbcast.lane.b32.xlu0 %v103, 256
    %v106 = vpop.permute.xlu0 %105
    %s108 = sor.u32 256, 8
    %109 = vbcast.lane.b32.xlu0 %v103, %s108
    %v110 = vpop.permute.xlu0 %109
    %v111 = vlaneseq
    %v112 = vshrl.u32 %v111, 7
    %v113 = vsub.s32 6, %v112
    %v114 = vrot.slane %v42, %v113
    %116 = vbcast.lane.b32.xlu0 %v114, 256
    %v117 = vpop.permute.xlu0 %116
    %s119 = sor.u32 256, 8
    %120 = vbcast.lane.b32.xlu0 %v114, %s119
    %v121 = vpop.permute.xlu0 %120
    %v122 = vlaneseq
    %v123 = vshrl.u32 %v122, 7
    %v124 = vsub.s32 7, %v123
    %v125 = vrot.slane %v42, %v124
    %127 = vbcast.lane.b32.xlu0 %v125, 256
    %v128 = vpop.permute.xlu0 %127
    %s130 = sor.u32 256, 8
    %131 = vbcast.lane.b32.xlu0 %v125, %s130
    %v132 = vpop.permute.xlu0 %131
    %vm133 = vcmp.eq.s32.totalorder %v51, %v44
    %vm134 = vcmp.eq.s32.totalorder %v55, %v44
    %vm135 = vcmp.eq.s32.totalorder %v62, %v44
    %vm136 = vcmp.eq.s32.totalorder %v66, %v44
    %vm137 = vcmp.eq.s32.totalorder %v73, %v44
    %vm138 = vcmp.eq.s32.totalorder %v77, %v44
    %vm139 = vcmp.eq.s32.totalorder %v84, %v44
    %vm140 = vcmp.eq.s32.totalorder %v88, %v44
    %vm141 = vcmp.eq.s32.totalorder %v95, %v44
    %vm142 = vcmp.eq.s32.totalorder %v99, %v44
    %vm143 = vcmp.eq.s32.totalorder %v106, %v44
    %vm144 = vcmp.eq.s32.totalorder %v110, %v44
    %vm145 = vcmp.eq.s32.totalorder %v117, %v44
    %vm146 = vcmp.eq.s32.totalorder %v121, %v44
    %vm147 = vcmp.eq.s32.totalorder %v128, %v44
    %vm148 = vcmp.eq.s32.totalorder %v132, %v44
    %v149 = vsel %vm133, 1, 0
    %v150 = vsel %vm134, 1, 0
    %v151 = vsel %vm135, 1, 0
    %v152 = vsel %vm136, 1, 0
    %v153 = vsel %vm137, 1, 0
    %v154 = vsel %vm138, 1, 0
    %v155 = vsel %vm139, 1, 0
    %v156 = vsel %vm140, 1, 0
    %v157 = vsel %vm141, 1, 0
    %v158 = vsel %vm142, 1, 0
    %v159 = vsel %vm143, 1, 0
    %v160 = vsel %vm144, 1, 0
    %v161 = vsel %vm145, 1, 0
    %v162 = vsel %vm146, 1, 0
    %v163 = vsel %vm147, 1, 0
    %v164 = vsel %vm148, 1, 0
    %v165 = vcvt.s32.f32 %v149
    %v166 = vcvt.s32.f32 %v150
    %v167 = vcvt.s32.f32 %v151
    %v168 = vcvt.s32.f32 %v152
    %v169 = vcvt.s32.f32 %v153
    %v170 = vcvt.s32.f32 %v154
    %v171 = vcvt.s32.f32 %v155
    %v172 = vcvt.s32.f32 %v156
    %v173 = vcvt.s32.f32 %v157
    %v174 = vcvt.s32.f32 %v158
    %v175 = vcvt.s32.f32 %v159
    %v176 = vcvt.s32.f32 %v160
    %v177 = vcvt.s32.f32 %v161
    %v178 = vcvt.s32.f32 %v162
    %v179 = vcvt.s32.f32 %v163
    %v180 = vcvt.s32.f32 %v164
    %v181 = vpack.c.bf16 %v166, %v165
    %v182 = vpack.c.bf16 %v168, %v167
    %v183 = vpack.c.bf16 %v170, %v169
    %v184 = vpack.c.bf16 %v172, %v171
    %v185 = vpack.c.bf16 %v174, %v173
    %v186 = vpack.c.bf16 %v176, %v175
    %v187 = vpack.c.bf16 %v178, %v177
    %v188 = vpack.c.bf16 %v180, %v179
    %v189 = vld [vmem:[%s1] sm:$0xf]
    %v190 = vld [vmem:[%s1 + $0x4] sm:$0xf]
    %v191 = vld [vmem:[%s1 + $0x8] sm:$0xf]
    %v192 = vld [vmem:[%s1 + $0xc] sm:$0xf]
    %v193 = vld [vmem:[%s1 + $0x10] sm:$0xf]
    %v194 = vld [vmem:[%s1 + $0x14] sm:$0xf]
    %v195 = vld [vmem:[%s1 + $0x18] sm:$0xf]
    %v196 = vld [vmem:[%s1 + $0x1c] sm:$0xf]
    %v197 = vld [vmem:[%s1 + $0x20] sm:$0xf]
    %v198 = vld [vmem:[%s1 + $0x24] sm:$0xf]
    %v199 = vld [vmem:[%s1 + $0x28] sm:$0xf]
    %v200 = vld [vmem:[%s1 + $0x2c] sm:$0xf]
    %v201 = vld [vmem:[%s1 + $0x30] sm:$0xf]
    %v202 = vld [vmem:[%s1 + $0x34] sm:$0xf]
    %v203 = vld [vmem:[%s1 + $0x38] sm:$0xf]
    %v204 = vld [vmem:[%s1 + $0x3c] sm:$0xf]
    %v221 = vunpack.c.l.b16 %v189
    %v222 = vunpack.c.l.b16 %v190
    %v223 = vunpack.c.l.b16 %v191
    %v224 = vunpack.c.l.b16 %v192
    %v225 = vunpack.c.l.b16 %v193
    %v226 = vunpack.c.l.b16 %v194
    %v227 = vunpack.c.l.b16 %v195
    %v228 = vunpack.c.l.b16 %v196
    %v229 = vunpack.c.l.b16 %v197
    %v230 = vunpack.c.l.b16 %v198
    %v231 = vunpack.c.l.b16 %v199
    %v232 = vunpack.c.l.b16 %v200
    %v233 = vunpack.c.l.b16 %v201
    %v234 = vunpack.c.l.b16 %v202
    %v235 = vunpack.c.l.b16 %v203
    %v236 = vunpack.c.l.b16 %v204
    %v237 = vpack.c.b16 %v222, %v221
    %v238 = vpack.c.b16 %v224, %v223
    %v239 = vpack.c.b16 %v226, %v225
    %v240 = vpack.c.b16 %v228, %v227
    %v241 = vpack.c.b16 %v230, %v229
    %v242 = vpack.c.b16 %v232, %v231
    %v243 = vpack.c.b16 %v234, %v233
    %v244 = vpack.c.b16 %v236, %v235
    %253 = vmatprep.subr.bf16.mxu0 0
    %254 = vmatpush1.bf16.msra.mxu0 %v244
    %255 = vmatprep.subr.bf16.mxu0 0
    %256 = vmatpush1.bf16.msra.mxu0 %v243
    %257 = vmatprep.subr.bf16.mxu0 0
    %258 = vmatpush1.bf16.msra.mxu0 %v242
    %259 = vmatprep.subr.bf16.mxu0 0
    %260 = vmatpush1.bf16.msra.mxu0 %v241
    %261 = vmatprep.subr.bf16.mxu0 0
    %262 = vmatpush1.bf16.msra.mxu0 %v240
    %263 = vmatprep.subr.bf16.mxu0 0
    %264 = vmatpush1.bf16.msra.mxu0 %v239
    %265 = vmatprep.subr.bf16.mxu0 0
    %266 = vmatpush1.bf16.msra.mxu0 %v238
    %267 = vmatprep.subr.bf16.mxu0 0
    %268 = vmatpush1.bf16.msra.mxu0 %v237
    %269 = vmatprep.subr.bf16.mxu0 0
    %270 = vmatpush2.bf16.msra.mxu0 0
    %271 = vmatprep.subr.bf16.mxu0 0
    %272 = vmatpush2.bf16.msra.mxu0 0
    %273 = vmatprep.subr.bf16.mxu0 0
    %274 = vmatpush2.bf16.msra.mxu0 0
    %275 = vmatprep.subr.bf16.mxu0 0
    %276 = vmatpush2.bf16.msra.mxu0 0
    %277 = vmatprep.subr.bf16.mxu0 0
    %278 = vmatpush2.bf16.msra.mxu0 0
    %279 = vmatprep.subr.bf16.mxu0 0
    %280 = vmatpush2.bf16.msra.mxu0 0
    %281 = vmatprep.subr.bf16.mxu0 0
    %282 = vmatpush2.bf16.msra.mxu0 0
    %283 = vmatprep.subr.bf16.mxu0 0
    %284 = vmatpush2.bf16.msra.mxu0 0
    %285 = vmatprep.mubr.bf16.mxu0 0
    %286 = vmatmul.mubr.bf16.gmra.mxu0 %v181
    %v287 = vpop.f32.mrf.mxu0
    %v288 = vadd.f32 0.0, %v287
    %v289 = vpop.f32.mrf.mxu0
    %v290 = vpop.f32.mrf.mxu0
    %v291 = vadd.f32 0.0, %v290
    %v292 = vpop.f32.mrf.mxu0
    %293 = vmatprep.mubr.bf16.mxu0 0
    %294 = vmatmul.mubr.bf16.gmra.mxu0 %v182
    %v295 = vpop.f32.mrf.mxu0
    %v296 = vadd.f32 0.0, %v295
    %v297 = vpop.f32.mrf.mxu0
    %v298 = vpop.f32.mrf.mxu0
    %v299 = vadd.f32 0.0, %v298
    %v300 = vpop.f32.mrf.mxu0
    %301 = vmatprep.mubr.bf16.mxu0 0
    %302 = vmatmul.mubr.bf16.gmra.mxu0 %v183
    %v303 = vpop.f32.mrf.mxu0
    %v304 = vadd.f32 0.0, %v303
    %v305 = vpop.f32.mrf.mxu0
    %v306 = vpop.f32.mrf.mxu0
    %v307 = vadd.f32 0.0, %v306
    %v308 = vpop.f32.mrf.mxu0
    %309 = vmatprep.mubr.bf16.mxu0 0
    %310 = vmatmul.mubr.bf16.gmra.mxu0 %v184
    %v311 = vpop.f32.mrf.mxu0
    %v312 = vadd.f32 0.0, %v311
    %v313 = vpop.f32.mrf.mxu0
    %v314 = vpop.f32.mrf.mxu0
    %v315 = vadd.f32 0.0, %v314
    %v316 = vpop.f32.mrf.mxu0
    %317 = vmatprep.mubr.bf16.mxu0 0
    %318 = vmatmul.mubr.bf16.gmra.mxu0 %v185
    %v319 = vpop.f32.mrf.mxu0
    %v320 = vadd.f32 0.0, %v319
    %v321 = vpop.f32.mrf.mxu0
    %v322 = vpop.f32.mrf.mxu0
    %v323 = vadd.f32 0.0, %v322
    %v324 = vpop.f32.mrf.mxu0
    %325 = vmatprep.mubr.bf16.mxu0 0
    %326 = vmatmul.mubr.bf16.gmra.mxu0 %v186
    %v327 = vpop.f32.mrf.mxu0
    %v328 = vadd.f32 0.0, %v327
    %v329 = vpop.f32.mrf.mxu0
    %v330 = vpop.f32.mrf.mxu0
    %v331 = vadd.f32 0.0, %v330
    %v332 = vpop.f32.mrf.mxu0
    %333 = vmatprep.mubr.bf16.mxu0 0
    %334 = vmatmul.mubr.bf16.gmra.mxu0 %v187
    %v335 = vpop.f32.mrf.mxu0
    %v336 = vadd.f32 0.0, %v335
    %v337 = vpop.f32.mrf.mxu0
    %v338 = vpop.f32.mrf.mxu0
    %v339 = vadd.f32 0.0, %v338
    %v340 = vpop.f32.mrf.mxu0
    %341 = vmatprep.mubr.bf16.mxu0 0
    %342 = vmatmul.mubr.bf16.gmra.mxu0 %v188
    %v343 = vpop.f32.mrf.mxu0
    %v344 = vadd.f32 0.0, %v343
    %v345 = vpop.f32.mrf.mxu0
    %v346 = vpop.f32.mrf.mxu0
    %v347 = vadd.f32 0.0, %v346
    %v348 = vpop.f32.mrf.mxu0
    %349 = vdwg.mxu0
    %v350 = vpack.c.bf16 %v291, %v288
    %v351 = vpack.c.bf16 %v299, %v296
    %v352 = vpack.c.bf16 %v307, %v304
    %v353 = vpack.c.bf16 %v315, %v312
    %v354 = vpack.c.bf16 %v323, %v320
    %v355 = vpack.c.bf16 %v331, %v328
    %v356 = vpack.c.bf16 %v339, %v336
    %v357 = vpack.c.bf16 %v347, %v344
    %vm358 = vsmask.f32 7424
    %v360 = vshrl.u32 %v350, 16
    %v362 = vshll.u32 %v350, 16
    %v364 = vrot.slane %v362, 1
    %v365 = vor.u32 %v360, %v364
    %v367 = vshll.u32 0, 16
    %v369 = vrot.slane %v367, 1
    %v370 = vsel %vm358, %v365, %v369
    %v372 = vshrl.u32 %v351, 16
    %v374 = vshll.u32 %v351, 16
    %v376 = vrot.slane %v374, 1
    %v377 = vor.u32 %v372, %v376
    %v378 = vsel %vm358, %v377, %v369
    %v380 = vshrl.u32 %v352, 16
    %v382 = vshll.u32 %v352, 16
    %v384 = vrot.slane %v382, 1
    %v385 = vor.u32 %v380, %v384
    %v386 = vsel %vm358, %v385, %v369
    %v388 = vshrl.u32 %v353, 16
    %v390 = vshll.u32 %v353, 16
    %v392 = vrot.slane %v390, 1
    %v393 = vor.u32 %v388, %v392
    %v394 = vsel %vm358, %v393, %v369
    %v396 = vshrl.u32 %v354, 16
    %v398 = vshll.u32 %v354, 16
    %v400 = vrot.slane %v398, 1
    %v401 = vor.u32 %v396, %v400
    %v402 = vsel %vm358, %v401, %v369
    %v404 = vshrl.u32 %v355, 16
    %v406 = vshll.u32 %v355, 16
    %v408 = vrot.slane %v406, 1
    %v409 = vor.u32 %v404, %v408
    %v410 = vsel %vm358, %v409, %v369
    %v412 = vshrl.u32 %v356, 16
    %v414 = vshll.u32 %v356, 16
    %v416 = vrot.slane %v414, 1
    %v417 = vor.u32 %v412, %v416
    %v418 = vsel %vm358, %v417, %v369
    %v420 = vshrl.u32 %v357, 16
    %v422 = vshll.u32 %v357, 16
    %v424 = vrot.slane %v422, 1
    %v425 = vor.u32 %v420, %v424
    %v426 = vsel %vm358, %v425, %v369
    %427 = vrot.lane.b32.xlu0 %v370, 32
    %v428 = vpop.permute.xlu0 %427
    %429 = vrot.lane.b32.xlu0 %v378, 32
    %v430 = vpop.permute.xlu0 %429
    %431 = vrot.lane.b32.xlu0 %v386, 32
    %v432 = vpop.permute.xlu0 %431
    %433 = vrot.lane.b32.xlu0 %v394, 32
    %v434 = vpop.permute.xlu0 %433
    %435 = vrot.lane.b32.xlu0 %v402, 32
    %v436 = vpop.permute.xlu0 %435
    %437 = vrot.lane.b32.xlu0 %v410, 32
    %v438 = vpop.permute.xlu0 %437
    %439 = vrot.lane.b32.xlu0 %v418, 32
    %v440 = vpop.permute.xlu0 %439
    %441 = vrot.lane.b32.xlu0 %v426, 32
    %v442 = vpop.permute.xlu0 %441
    %vm452 = vcmask 1046528
    %v453 = vrot.slane %v350, 1
    %v454 = vrot.slane 0, 1
    %v455 = vsel %vm452, %v453, %v454
    %v456 = vrot.slane %v351, 1
    %v457 = vsel %vm452, %v456, %v454
    %v458 = vrot.slane %v352, 1
    %v459 = vsel %vm452, %v458, %v454
    %v460 = vrot.slane %v353, 1
    %v461 = vsel %vm452, %v460, %v454
    %v462 = vrot.slane %v354, 1
    %v463 = vsel %vm452, %v462, %v454
    %v464 = vrot.slane %v355, 1
    %v465 = vsel %vm452, %v464, %v454
    %v466 = vrot.slane %v356, 1
    %v467 = vsel %vm452, %v466, %v454
    %v468 = vrot.slane %v357, 1
    %v469 = vsel %vm452, %v468, %v454
    %470 = vrot.lane.b32.xlu0 %v455, 64
    %v471 = vpop.permute.xlu0 %470
    %472 = vrot.lane.b32.xlu0 %v457, 64
    %v473 = vpop.permute.xlu0 %472
    %474 = vrot.lane.b32.xlu0 %v459, 64
    %v475 = vpop.permute.xlu0 %474
    %476 = vrot.lane.b32.xlu0 %v461, 64
    %v477 = vpop.permute.xlu0 %476
    %478 = vrot.lane.b32.xlu0 %v463, 64
    %v479 = vpop.permute.xlu0 %478
    %480 = vrot.lane.b32.xlu0 %v465, 64
    %v481 = vpop.permute.xlu0 %480
    %482 = vrot.lane.b32.xlu0 %v467, 64
    %v483 = vpop.permute.xlu0 %482
    %484 = vrot.lane.b32.xlu0 %v469, 64
    %v485 = vpop.permute.xlu0 %484
    %vm486 = vsmask.f32 6400
    %v487 = vrot.slane %v360, 1
    %v488 = vrot.slane %v362, 2
    %v489 = vor.u32 %v487, %v488
    %v490 = vshrl.u32 0, 16
    %v492 = vrot.slane %v490, 1
    %v493 = vrot.slane %v367, 2
    %v494 = vor.u32 %v492, %v493
    %v495 = vsel %vm486, %v489, %v494
    %v496 = vrot.slane %v372, 1
    %v497 = vrot.slane %v374, 2
    %v498 = vor.u32 %v496, %v497
    %v499 = vsel %vm486, %v498, %v494
    %v500 = vrot.slane %v380, 1
    %v501 = vrot.slane %v382, 2
    %v502 = vor.u32 %v500, %v501
    %v503 = vsel %vm486, %v502, %v494
    %v504 = vrot.slane %v388, 1
    %v505 = vrot.slane %v390, 2
    %v506 = vor.u32 %v504, %v505
    %v507 = vsel %vm486, %v506, %v494
    %v508 = vrot.slane %v396, 1
    %v509 = vrot.slane %v398, 2
    %v510 = vor.u32 %v508, %v509
    %v511 = vsel %vm486, %v510, %v494
    %v512 = vrot.slane %v404, 1
    %v513 = vrot.slane %v406, 2
    %v514 = vor.u32 %v512, %v513
    %v515 = vsel %vm486, %v514, %v494
    %v516 = vrot.slane %v412, 1
    %v517 = vrot.slane %v414, 2
    %v518 = vor.u32 %v516, %v517
    %v519 = vsel %vm486, %v518, %v494
    %v520 = vrot.slane %v420, 1
    %v521 = vrot.slane %v422, 2
    %v522 = vor.u32 %v520, %v521
    %v523 = vsel %vm486, %v522, %v494
    %524 = vrot.lane.b32.xlu0 %v495, 96
    %v525 = vpop.permute.xlu0 %524
    %526 = vrot.lane.b32.xlu0 %v499, 96
    %v527 = vpop.permute.xlu0 %526
    %528 = vrot.lane.b32.xlu0 %v503, 96
    %v529 = vpop.permute.xlu0 %528
    %530 = vrot.lane.b32.xlu0 %v507, 96
    %v531 = vpop.permute.xlu0 %530
    %532 = vrot.lane.b32.xlu0 %v511, 96
    %v533 = vpop.permute.xlu0 %532
    %534 = vrot.lane.b32.xlu0 %v515, 96
    %v535 = vpop.permute.xlu0 %534
    %536 = vrot.lane.b32.xlu0 %v519, 96
    %v537 = vpop.permute.xlu0 %536
    %538 = vrot.lane.b32.xlu0 %v523, 96
    %v539 = vpop.permute.xlu0 %538
    %vm540 = vcmask 1045504
    %v541 = vrot.slane %v350, 2
    %v542 = vrot.slane 0, 2
    %v543 = vsel %vm540, %v541, %v542
    %v544 = vrot.slane %v351, 2
    %v545 = vsel %vm540, %v544, %v542
    %v546 = vrot.slane %v352, 2
    %v547 = vsel %vm540, %v546, %v542
    %v548 = vrot.slane %v353, 2
    %v549 = vsel %vm540, %v548, %v542
    %v550 = vrot.slane %v354, 2
    %v551 = vsel %vm540, %v550, %v542
    %v552 = vrot.slane %v355, 2
    %v553 = vsel %vm540, %v552, %v542
    %v554 = vrot.slane %v356, 2
    %v555 = vsel %vm540, %v554, %v542
    %v556 = vrot.slane %v357, 2
    %v557 = vsel %vm540, %v556, %v542
    %vm558 = vcmask 261120
    %v560 = vsel %vm558, %v350, %v428
    %v562 = vsel %vm558, %v351, %v430
    %v564 = vsel %vm558, %v352, %v432
    %v566 = vsel %vm558, %v353, %v434
    %v568 = vsel %vm558, %v354, %v436
    %v570 = vsel %vm558, %v355, %v438
    %v572 = vsel %vm558, %v356, %v440
    %v574 = vsel %vm558, %v357, %v442
    %vm575 = vcmask 523264
    %v577 = vsel %vm575, %v560, %v471
    %v579 = vsel %vm575, %v562, %v473
    %v581 = vsel %vm575, %v564, %v475
    %v583 = vsel %vm575, %v566, %v477
    %v585 = vsel %vm575, %v568, %v479
    %v587 = vsel %vm575, %v570, %v481
    %v589 = vsel %vm575, %v572, %v483
    %v591 = vsel %vm575, %v574, %v485
    %vm592 = vcmask 785408
    %v594 = vsel %vm592, %v577, %v525
    %v597 = vsel %vm592, %v579, %v527
    %v600 = vsel %vm592, %v581, %v529
    %v603 = vsel %vm592, %v583, %v531
    %v606 = vsel %vm592, %v585, %v533
    %v609 = vsel %vm592, %v587, %v535
    %v612 = vsel %vm592, %v589, %v537
    %v615 = vsel %vm592, %v591, %v539
    %v618 = vsel %vm558, %v543, 0
    %v621 = vsel %vm558, %v545, 0
    %v624 = vsel %vm558, %v547, 0
    %v627 = vsel %vm558, %v549, 0
    %v630 = vsel %vm558, %v551, 0
    %v633 = vsel %vm558, %v553, 0
    %v636 = vsel %vm558, %v555, 0
    %v639 = vsel %vm558, %v557, 0
    %v641 = vld [vmem:[#allocation2] sm:$0xf]
    %v642 = vld [vmem:[#allocation2 + $0x4] sm:$0xf]
    %v643 = vld [vmem:[#allocation2 + $0x8] sm:$0xf]
    %v644 = vld [vmem:[#allocation2 + $0xc] sm:$0xf]
    %v645 = vld [vmem:[#allocation2 + $0x10] sm:$0xf]
    %v646 = vld [vmem:[#allocation2 + $0x14] sm:$0xf]
    %v647 = vld [vmem:[#allocation2 + $0x18] sm:$0xf]
    %v648 = vld [vmem:[#allocation2 + $0x1c] sm:$0xf]
    %v649 = vld [vmem:[#allocation2 + $0x20] sm:$0xf]
    %v650 = vld [vmem:[#allocation2 + $0x24] sm:$0xf]
    %v651 = vld [vmem:[#allocation2 + $0x28] sm:$0xf]
    %v652 = vld [vmem:[#allocation2 + $0x2c] sm:$0xf]
    %v653 = vld [vmem:[#allocation2 + $0x30] sm:$0xf]
    %v654 = vld [vmem:[#allocation2 + $0x34] sm:$0xf]
    %v655 = vld [vmem:[#allocation2 + $0x38] sm:$0xf]
    %v656 = vld [vmem:[#allocation2 + $0x3c] sm:$0xf]
    %v657 = vld [vmem:[#allocation2 + $0x40] sm:$0xf]
    %v658 = vld [vmem:[#allocation2 + $0x44] sm:$0xf]
    %v659 = vld [vmem:[#allocation2 + $0x48] sm:$0xf]
    %v660 = vld [vmem:[#allocation2 + $0x4c] sm:$0xf]
    %v661 = vld [vmem:[#allocation2 + $0x50] sm:$0xf]
    %v662 = vld [vmem:[#allocation2 + $0x54] sm:$0xf]
    %v663 = vld [vmem:[#allocation2 + $0x58] sm:$0xf]
    %v664 = vld [vmem:[#allocation2 + $0x5c] sm:$0xf]
    %v665 = vld [vmem:[#allocation2 + $0x60] sm:$0xf]
    %v666 = vld [vmem:[#allocation2 + $0x64] sm:$0xf]
    %v667 = vld [vmem:[#allocation2 + $0x68] sm:$0xf]
    %v668 = vld [vmem:[#allocation2 + $0x6c] sm:$0xf]
    %v669 = vld [vmem:[#allocation2 + $0x70] sm:$0xf]
    %v670 = vld [vmem:[#allocation2 + $0x74] sm:$0xf]
    %v671 = vld [vmem:[#allocation2 + $0x78] sm:$0xf]
    %v672 = vld [vmem:[#allocation2 + $0x7c] sm:$0xf]
    %v705 = vunpack.c.l.b16 %v641
    %v706 = vunpack.c.l.b16 %v642
    %v707 = vunpack.c.l.b16 %v643
    %v708 = vunpack.c.l.b16 %v644
    %v709 = vunpack.c.l.b16 %v645
    %v710 = vunpack.c.l.b16 %v646
    %v711 = vunpack.c.l.b16 %v647
    %v712 = vunpack.c.l.b16 %v648
    %v713 = vunpack.c.l.b16 %v649
    %v714 = vunpack.c.l.b16 %v650
    %v715 = vunpack.c.l.b16 %v651
    %v716 = vunpack.c.l.b16 %v652
    %v717 = vunpack.c.l.b16 %v653
    %v718 = vunpack.c.l.b16 %v654
    %v719 = vunpack.c.l.b16 %v655
    %v720 = vunpack.c.l.b16 %v656
    %v721 = vunpack.c.l.b16 %v657
    %v722 = vunpack.c.l.b16 %v658
    %v723 = vunpack.c.l.b16 %v659
    %v724 = vunpack.c.l.b16 %v660
    %v725 = vunpack.c.l.b16 %v661
    %v726 = vunpack.c.l.b16 %v662
    %v727 = vunpack.c.l.b16 %v663
    %v728 = vunpack.c.l.b16 %v664
    %v729 = vunpack.c.l.b16 %v665
    %v730 = vunpack.c.l.b16 %v666
    %v731 = vunpack.c.l.b16 %v667
    %v732 = vunpack.c.l.b16 %v668
    %v733 = vunpack.c.l.b16 %v669
    %v734 = vunpack.c.l.b16 %v670
    %v735 = vunpack.c.l.b16 %v671
    %v736 = vunpack.c.l.b16 %v672
    %v737 = vpack.c.b16 %v706, %v705
    %v738 = vpack.c.b16 %v708, %v707
    %v739 = vpack.c.b16 %v710, %v709
    %v740 = vpack.c.b16 %v712, %v711
    %v741 = vpack.c.b16 %v714, %v713
    %v742 = vpack.c.b16 %v716, %v715
    %v743 = vpack.c.b16 %v718, %v717
    %v744 = vpack.c.b16 %v720, %v719
    %v745 = vpack.c.b16 %v722, %v721
    %v746 = vpack.c.b16 %v724, %v723
    %v747 = vpack.c.b16 %v726, %v725
    %v748 = vpack.c.b16 %v728, %v727
    %v749 = vpack.c.b16 %v730, %v729
    %v750 = vpack.c.b16 %v732, %v731
    %v751 = vpack.c.b16 %v734, %v733
    %v752 = vpack.c.b16 %v736, %v735
    %769 = vmatprep.subr.bf16.mxu0 0
    %770 = vmatpush1.bf16.msra.mxu0 %v744
    %771 = vmatprep.subr.bf16.mxu0 0
    %772 = vmatpush1.bf16.msra.mxu0 %v743
    %773 = vmatprep.subr.bf16.mxu0 0
    %774 = vmatpush1.bf16.msra.mxu0 %v742
    %775 = vmatprep.subr.bf16.mxu0 0
    %776 = vmatpush1.bf16.msra.mxu0 %v741
    %777 = vmatprep.subr.bf16.mxu0 0
    %778 = vmatpush1.bf16.msra.mxu0 %v740
    %779 = vmatprep.subr.bf16.mxu0 0
    %780 = vmatpush1.bf16.msra.mxu0 %v739
    %781 = vmatprep.subr.bf16.mxu0 0
    %782 = vmatpush1.bf16.msra.mxu0 %v738
    %783 = vmatprep.subr.bf16.mxu0 0
    %784 = vmatpush1.bf16.msra.mxu0 %v737
    %785 = vmatprep.subr.bf16.mxu0 0
    %786 = vmatpush2.bf16.msra.mxu0 %v752
    %787 = vmatprep.subr.bf16.mxu0 0
    %788 = vmatpush2.bf16.msra.mxu0 %v751
    %789 = vmatprep.subr.bf16.mxu0 0
    %790 = vmatpush2.bf16.msra.mxu0 %v750
    %791 = vmatprep.subr.bf16.mxu0 0
    %792 = vmatpush2.bf16.msra.mxu0 %v749
    %793 = vmatprep.subr.bf16.mxu0 0
    %794 = vmatpush2.bf16.msra.mxu0 %v748
    %795 = vmatprep.subr.bf16.mxu0 0
    %796 = vmatpush2.bf16.msra.mxu0 %v747
    %797 = vmatprep.subr.bf16.mxu0 0
    %798 = vmatpush2.bf16.msra.mxu0 %v746
    %799 = vmatprep.subr.bf16.mxu0 0
    %800 = vmatpush2.bf16.msra.mxu0 %v745
    %801 = vmatprep.mubr.bf16.mxu0 %v618
    %802 = vmatmul.mubr.bf16.gmra.mxu0 %v594
    %v803 = vpop.f32.mrf.mxu0
    %v804 = vadd.f32 0.0, %v803
    %v805 = vpop.f32.mrf.mxu0
    %v806 = vpop.f32.mrf.mxu0
    %v807 = vadd.f32 0.0, %v806
    %v808 = vpop.f32.mrf.mxu0
    %809 = vmatprep.mubr.bf16.mxu0 %v621
    %810 = vmatmul.mubr.bf16.gmra.mxu0 %v597
    %v811 = vpop.f32.mrf.mxu0
    %v812 = vadd.f32 0.0, %v811
    %v813 = vpop.f32.mrf.mxu0
    %v814 = vpop.f32.mrf.mxu0
    %v815 = vadd.f32 0.0, %v814
    %v816 = vpop.f32.mrf.mxu0
    %817 = vmatprep.mubr.bf16.mxu0 %v624
    %818 = vmatmul.mubr.bf16.gmra.mxu0 %v600
    %v819 = vpop.f32.mrf.mxu0
    %v820 = vadd.f32 0.0, %v819
    %v821 = vpop.f32.mrf.mxu0
    %v822 = vpop.f32.mrf.mxu0
    %v823 = vadd.f32 0.0, %v822
    %v824 = vpop.f32.mrf.mxu0
    %825 = vmatprep.mubr.bf16.mxu0 %v627
    %826 = vmatmul.mubr.bf16.gmra.mxu0 %v603
    %v827 = vpop.f32.mrf.mxu0
    %v828 = vadd.f32 0.0, %v827
    %v829 = vpop.f32.mrf.mxu0
    %v830 = vpop.f32.mrf.mxu0
    %v831 = vadd.f32 0.0, %v830
    %v832 = vpop.f32.mrf.mxu0
    %833 = vmatprep.mubr.bf16.mxu0 %v630
    %834 = vmatmul.mubr.bf16.gmra.mxu0 %v606
    %v835 = vpop.f32.mrf.mxu0
    %v836 = vadd.f32 0.0, %v835
    %v837 = vpop.f32.mrf.mxu0
    %v838 = vpop.f32.mrf.mxu0
    %v839 = vadd.f32 0.0, %v838
    %v840 = vpop.f32.mrf.mxu0
    %841 = vmatprep.mubr.bf16.mxu0 %v633
    %842 = vmatmul.mubr.bf16.gmra.mxu0 %v609
    %v843 = vpop.f32.mrf.mxu0
    %v844 = vadd.f32 0.0, %v843
    %v845 = vpop.f32.mrf.mxu0
    %v846 = vpop.f32.mrf.mxu0
    %v847 = vadd.f32 0.0, %v846
    %v848 = vpop.f32.mrf.mxu0
    %849 = vmatprep.mubr.bf16.mxu0 %v636
    %850 = vmatmul.mubr.bf16.gmra.mxu0 %v612
    %v851 = vpop.f32.mrf.mxu0
    %v852 = vadd.f32 0.0, %v851
    %v853 = vpop.f32.mrf.mxu0
    %v854 = vpop.f32.mrf.mxu0
    %v855 = vadd.f32 0.0, %v854
    %v856 = vpop.f32.mrf.mxu0
    %857 = vmatprep.mubr.bf16.mxu0 %v639
    %858 = vmatmul.mubr.bf16.gmra.mxu0 %v615
    %v859 = vpop.f32.mrf.mxu0
    %v860 = vadd.f32 0.0, %v859
    %v861 = vpop.f32.mrf.mxu0
    %v862 = vpop.f32.mrf.mxu0
    %v863 = vadd.f32 0.0, %v862
    %v864 = vpop.f32.mrf.mxu0
    %865 = vdwg.mxu0
    %v866 = vld [vmem:[%s3] sm:$0x1]
    %v868 = vlaneseq
    %v869 = vshrl.u32 %v868, 7
    %v870 = vsub.s32 0, %v869
    %v871 = vrot.slane %v866, %v870
    %v873 = vadd.f32 %v804, %v871
    %v874 = vadd.f32 %v807, %v871
    %v875 = vadd.f32 %v812, %v871
    %v876 = vadd.f32 %v815, %v871
    %v877 = vadd.f32 %v820, %v871
    %v878 = vadd.f32 %v823, %v871
    %v879 = vadd.f32 %v828, %v871
    %v880 = vadd.f32 %v831, %v871
    %v881 = vadd.f32 %v836, %v871
    %v882 = vadd.f32 %v839, %v871
    %v883 = vadd.f32 %v844, %v871
    %v884 = vadd.f32 %v847, %v871
    %v885 = vadd.f32 %v852, %v871
    %v886 = vadd.f32 %v855, %v871
    %v887 = vadd.f32 %v860, %v871
    %v888 = vadd.f32 %v863, %v871
    %v889 = vmax.f32 %v873, 0.0
    %v890 = vmax.f32 %v874, 0.0
    %v891 = vmax.f32 %v875, 0.0
    %v892 = vmax.f32 %v876, 0.0
    %v893 = vmax.f32 %v877, 0.0
    %v894 = vmax.f32 %v878, 0.0
    %v895 = vmax.f32 %v879, 0.0
    %v896 = vmax.f32 %v880, 0.0
    %v897 = vmax.f32 %v881, 0.0
    %v898 = vmax.f32 %v882, 0.0
    %v899 = vmax.f32 %v883, 0.0
    %v900 = vmax.f32 %v884, 0.0
    %v901 = vmax.f32 %v885, 0.0
    %v902 = vmax.f32 %v886, 0.0
    %v903 = vmax.f32 %v887, 0.0
    %v904 = vmax.f32 %v888, 0.0
    %v905 = vld [vmem:[%s4] sm:$0xff]
    %v906 = vld [vmem:[%s4 + $0x8] sm:$0xff]
    %v907 = vmul.f32 %v889, %v905
    %v908 = vmul.f32 %v890, %v906
    %v909 = vmul.f32 %v891, %v905
    %v910 = vmul.f32 %v892, %v906
    %v911 = vmul.f32 %v893, %v905
    %v912 = vmul.f32 %v894, %v906
    %v913 = vmul.f32 %v895, %v905
    %v914 = vmul.f32 %v896, %v906
    %v915 = vmul.f32 %v897, %v905
    %v916 = vmul.f32 %v898, %v906
    %v917 = vmul.f32 %v899, %v905
    %v918 = vmul.f32 %v900, %v906
    %v919 = vmul.f32 %v901, %v905
    %v920 = vmul.f32 %v902, %v906
    %v921 = vmul.f32 %v903, %v905
    %v922 = vmul.f32 %v904, %v906
    %v923 = vmax.f32 %v907, %v908
    %v924 = vrot.slane %v923, 4
    %v925 = vmax.f32 %v923, %v924
    %v926 = vrot.slane %v925, 2
    %v927 = vmax.f32 %v925, %v926
    %v928 = vrot.slane %v927, 1
    %v929 = vmax.f32 %v927, %v928
    %v930 = vmax.f32 %v909, %v910
    %v931 = vrot.slane %v930, 4
    %v932 = vmax.f32 %v930, %v931
    %v933 = vrot.slane %v932, 2
    %v934 = vmax.f32 %v932, %v933
    %v935 = vrot.slane %v934, 1
    %v936 = vmax.f32 %v934, %v935
    %v937 = vmax.f32 %v911, %v912
    %v938 = vrot.slane %v937, 4
    %v939 = vmax.f32 %v937, %v938
    %v940 = vrot.slane %v939, 2
    %v941 = vmax.f32 %v939, %v940
    %v942 = vrot.slane %v941, 1
    %v943 = vmax.f32 %v941, %v942
    %v944 = vmax.f32 %v913, %v914
    %v945 = vrot.slane %v944, 4
    %v946 = vmax.f32 %v944, %v945
    %v947 = vrot.slane %v946, 2
    %v948 = vmax.f32 %v946, %v947
    %v949 = vrot.slane %v948, 1
    %v950 = vmax.f32 %v948, %v949
    %v951 = vmax.f32 %v915, %v916
    %v952 = vrot.slane %v951, 4
    %v953 = vmax.f32 %v951, %v952
    %v954 = vrot.slane %v953, 2
    %v955 = vmax.f32 %v953, %v954
    %v956 = vrot.slane %v955, 1
    %v957 = vmax.f32 %v955, %v956
    %v958 = vmax.f32 %v917, %v918
    %v959 = vrot.slane %v958, 4
    %v960 = vmax.f32 %v958, %v959
    %v961 = vrot.slane %v960, 2
    %v962 = vmax.f32 %v960, %v961
    %v963 = vrot.slane %v962, 1
    %v964 = vmax.f32 %v962, %v963
    %v965 = vmax.f32 %v919, %v920
    %v966 = vrot.slane %v965, 4
    %v967 = vmax.f32 %v965, %v966
    %v968 = vrot.slane %v967, 2
    %v969 = vmax.f32 %v967, %v968
    %v970 = vrot.slane %v969, 1
    %v971 = vmax.f32 %v969, %v970
    %v972 = vmax.f32 %v921, %v922
    %v973 = vrot.slane %v972, 4
    %v974 = vmax.f32 %v972, %v973
    %v975 = vrot.slane %v974, 2
    %v976 = vmax.f32 %v974, %v975
    %v977 = vrot.slane %v976, 1
    %v978 = vmax.f32 %v976, %v977
    %v979 = vpack.c.bf16 %v929, %v929
    %v980 = vpack.c.bf16 %v936, %v936
    %v981 = vpack.c.bf16 %v943, %v943
    %v982 = vpack.c.bf16 %v950, %v950
    %v983 = vpack.c.bf16 %v957, %v957
    %v984 = vpack.c.bf16 %v964, %v964
    %v985 = vpack.c.bf16 %v971, %v971
    %v986 = vpack.c.bf16 %v978, %v978
    %v987 = vld [vmem:[%s5] sm:$0xf]
    %v988 = vld [vmem:[%s5 + $0x4] sm:$0xf]
    %v989 = vld [vmem:[%s5 + $0x8] sm:$0xf]
    %v990 = vld [vmem:[%s5 + $0xc] sm:$0xf]
    %v991 = vld [vmem:[%s5 + $0x10] sm:$0xf]
    %v992 = vld [vmem:[%s5 + $0x14] sm:$0xf]
    %v993 = vld [vmem:[%s5 + $0x18] sm:$0xf]
    %v994 = vld [vmem:[%s5 + $0x1c] sm:$0xf]
    %v995 = vld [vmem:[%s5 + $0x20] sm:$0xf]
    %v996 = vld [vmem:[%s5 + $0x24] sm:$0xf]
    %v997 = vld [vmem:[%s5 + $0x28] sm:$0xf]
    %v998 = vld [vmem:[%s5 + $0x2c] sm:$0xf]
    %v999 = vld [vmem:[%s5 + $0x30] sm:$0xf]
    %v1000 = vld [vmem:[%s5 + $0x34] sm:$0xf]
    %v1001 = vld [vmem:[%s5 + $0x38] sm:$0xf]
    %v1002 = vld [vmem:[%s5 + $0x3c] sm:$0xf]
    %v1003 = vld [vmem:[%s6] sm:$0x1]
    %v1005 = vlaneseq
    %v1006 = vshrl.u32 %v1005, 7
    %v1007 = vsub.s32 0, %v1006
    %v1008 = vrot.slane %v1003, %v1007
    %v1018 = vunpack.c.l.b16 %v979
    %v1019 = vunpack.c.l.b16 %v980
    %v1020 = vunpack.c.l.b16 %v981
    %v1021 = vunpack.c.l.b16 %v982
    %v1022 = vunpack.c.l.b16 %v983
    %v1023 = vunpack.c.l.b16 %v984
    %v1024 = vunpack.c.l.b16 %v985
    %v1025 = vunpack.c.l.b16 %v986
    %vm1026 = vcmask 1041409
    %v1027 = vsel %vm1026, %v1019, %v1018
    %vm1028 = vcmask 1042434
    %v1029 = vsel %vm1028, %v1020, %v1027
    %vm1030 = vcmask 1043459
    %v1031 = vsel %vm1030, %v1021, %v1029
    %vm1032 = vcmask 1044484
    %v1033 = vsel %vm1032, %v1022, %v1031
    %vm1034 = vcmask 1045509
    %v1035 = vsel %vm1034, %v1023, %v1033
    %vm1036 = vcmask 1046534
    %v1037 = vsel %vm1036, %v1024, %v1035
    %vm1038 = vcmask 1047559
    %v1039 = vsel %vm1038, %v1025, %v1037
    %v1040 = vpack.c.b16 %v1039, %v1039
    %v1058 = vunpack.c.l.b16 %v987
    %v1059 = vunpack.c.l.b16 %v988
    %v1060 = vunpack.c.l.b16 %v989
    %v1061 = vunpack.c.l.b16 %v990
    %v1062 = vunpack.c.l.b16 %v991
    %v1063 = vunpack.c.l.b16 %v992
    %v1064 = vunpack.c.l.b16 %v993
    %v1065 = vunpack.c.l.b16 %v994
    %v1066 = vunpack.c.l.b16 %v995
    %v1067 = vunpack.c.l.b16 %v996
    %v1068 = vunpack.c.l.b16 %v997
    %v1069 = vunpack.c.l.b16 %v998
    %v1070 = vunpack.c.l.b16 %v999
    %v1071 = vunpack.c.l.b16 %v1000
    %v1072 = vunpack.c.l.b16 %v1001
    %v1073 = vunpack.c.l.b16 %v1002
    %v1074 = vpack.c.b16 %v1059, %v1058
    %v1075 = vpack.c.b16 %v1061, %v1060
    %v1076 = vpack.c.b16 %v1063, %v1062
    %v1077 = vpack.c.b16 %v1065, %v1064
    %v1078 = vpack.c.b16 %v1067, %v1066
    %v1079 = vpack.c.b16 %v1069, %v1068
    %v1080 = vpack.c.b16 %v1071, %v1070
    %v1081 = vpack.c.b16 %v1073, %v1072
    %1090 = vmatprep.subr.bf16.mxu0 0
    %1091 = vmatpush1.bf16.msra.mxu0 %v1081
    %1092 = vmatprep.subr.bf16.mxu0 0
    %1093 = vmatpush1.bf16.msra.mxu0 %v1080
    %1094 = vmatprep.subr.bf16.mxu0 0
    %1095 = vmatpush1.bf16.msra.mxu0 %v1079
    %1096 = vmatprep.subr.bf16.mxu0 0
    %1097 = vmatpush1.bf16.msra.mxu0 %v1078
    %1098 = vmatprep.subr.bf16.mxu0 0
    %1099 = vmatpush1.bf16.msra.mxu0 %v1077
    %1100 = vmatprep.subr.bf16.mxu0 0
    %1101 = vmatpush1.bf16.msra.mxu0 %v1076
    %1102 = vmatprep.subr.bf16.mxu0 0
    %1103 = vmatpush1.bf16.msra.mxu0 %v1075
    %1104 = vmatprep.subr.bf16.mxu0 0
    %1105 = vmatpush1.bf16.msra.mxu0 %v1074
    %1106 = vmatprep.subr.bf16.mxu0 0
    %1107 = vmatpush2.bf16.msra.mxu0 0
    %1108 = vmatprep.subr.bf16.mxu0 0
    %1109 = vmatpush2.bf16.msra.mxu0 0
    %1110 = vmatprep.subr.bf16.mxu0 0
    %1111 = vmatpush2.bf16.msra.mxu0 0
    %1112 = vmatprep.subr.bf16.mxu0 0
    %1113 = vmatpush2.bf16.msra.mxu0 0
    %1114 = vmatprep.subr.bf16.mxu0 0
    %1115 = vmatpush2.bf16.msra.mxu0 0
    %1116 = vmatprep.subr.bf16.mxu0 0
    %1117 = vmatpush2.bf16.msra.mxu0 0
    %1118 = vmatprep.subr.bf16.mxu0 0
    %1119 = vmatpush2.bf16.msra.mxu0 0
    %1120 = vmatprep.subr.bf16.mxu0 0
    %1121 = vmatpush2.bf16.msra.mxu0 0
    %1122 = vmatprep.mubr.bf16.mxu0 0
    %1123 = vmatmul.mubr.bf16.gmra.mxu0 %v1040
    %v1124 = vpop.f32.mrf.mxu0
    %v1125 = vadd.f32 %v1008, %v1124
    %v1126 = vpop.f32.mrf.mxu0
    %v1127 = vpop.f32.mrf.mxu0
    %v1128 = vpop.f32.mrf.mxu0
    %1129 = vdwg.mxu0
    %1130 = vst [vmem:[#allocation5] sm:$0xff] %v1125
    // Predicated region
    $region34: #{tpu_custom_call.1} parent=1 // pred_check
      _
    $region35: #{tpu_custom_call.1} parent=1 // pred_check_branch
      %1132 = sbr.rel (0) target = $region37
    $region36: #{tpu_custom_call.1} parent=1 // pred_region
      %s1134 = ssub.s32 128, 128
      %1135 = vsyncadd [#allocation4], %s1134
      %s1137 = sshll.u32 [#allocation5], 4
      %s1138 = int_to_ptr.vmem [resolvable:$true] %s1137
      %1140 = dma.vmem_to_hbm [thread:$0]  %s1138, 128, %s7, [#allocation4]
    $region37: #{tpu_custom_call.1} parent=1 // pred_fallthru
      _
    // Predicated region
    $region38: #{tpu_custom_call.1} parent=1 // pred_check
      _
    $region39: #{tpu_custom_call.1} parent=1 // pred_check_branch
      %1142 = sbr.rel (0) target = $region41
    $region40: #{tpu_custom_call.1} parent=1 // pred_region
      %1143 = dma.done [#allocation4], 128
    $region41: #{tpu_custom_call.1} parent=1 // pred_fallthru
      _
    %1144 = vsyncpa [#allocation3], 1
    %1145 = vsyncpa [#allocation4], 1

</llo_original>
